<compile_context>
chip_gen: v5e
topology: v5e:2x2
jax: 0.10.0
libtpu: 0.0.40
codegen_flags: <defaults>
</compile_context>

<pallas_src>
import numpy as np

import jax
import jax.numpy as jnp
from jax import lax
from jax.experimental import pallas as pl
from jax.experimental.pallas import tpu as pltpu


_EPS = 1e-20


# ----------------------------- small helpers --------------------------------

def _elu(h):
    # ELU(alpha=1).  Clamp before exp so the unselected branch of where()
    # cannot overflow for large positive pre-activations.
    return jnp.where(h > 0, h, jnp.exp(jnp.minimum(h, 0.0)) - 1.0)


def _gumbel_from_uniform(u, scale_col):
    """torch: noise = rand-0.5; samples = scale*noise+0.5; -log(-log(s+eps)).
    `scale_col` is [rows, 1] (one knn scale per row, broadcast along lanes).
    Samples are clamped into (0, 1) so scales > 1 cannot produce NaNs."""
    samples = scale_col * (u - 0.5) + 0.5
    samples = jnp.clip(samples, _EPS, 1.0 - 1e-7)
    return -jnp.log(-jnp.log(samples + _EPS) + _EPS)


def _channel_max(y, n_channels, dim):
    """Per-channel (width-`dim` lane segment) max, broadcast back to lanes.
    Built once per kernel; the lane iota / masks are not duplicated."""
    lane = lax.broadcasted_iota(jnp.int32, y.shape, 1)
    maxseg = jnp.zeros_like(y)
    for c in range(n_channels):
        m = jnp.logical_and(lane >= c * dim, lane < (c + 1) * dim)
        mc = jnp.max(jnp.where(m, y, -jnp.inf), axis=-1, keepdims=True)
        maxseg = jnp.where(m, mc, maxseg)
    return maxseg


# ------------------------------ fused kernels --------------------------------

def _make_train_kernel(K, C, D):
    def kernel(x_ref, t_ref, u_ref, scale_ref,
               xm_ref, xs_ref, ym_ref, ys_ref,
               w1x_ref, w1t_ref, b1_ref, w2_ref, b2_ref,
               segsum_ref, dw1_ref, db1_ref, dw2_ref, db2_ref,
               y_ref, logits_ref, prob_ref, hard_ref):
        xn = (x_ref[...] - xm_ref[...]) / xs_ref[...]          # Normalize(x, XNorm)
        tn = (t_ref[...] - ym_ref[...]) / ys_ref[...]          # Normalize(t, YNorm)

        # Encoder + Estimator fused: layer-1 is one wide matmul on xn (enc|est
        # halves), enc's extra `tn` term uses a zero-padded weight; layer-2 is
        # block-diagonal so the two heads stay independent.  No concat needed.
        h = _elu(jnp.dot(xn, w1x_ref[...], preferred_element_type=jnp.float32)
                 + jnp.dot(tn, w1t_ref[...], preferred_element_type=jnp.float32)
                 + b1_ref[...])
        logits = (jnp.dot(h, w2_ref[...], preferred_element_type=jnp.float32)
                  + b2_ref[...])                               # [B, 2L] = tlog|elog
        logits_ref[...] = logits

        # Gumbel-softmax for ALL K noise scales and BOTH heads in one slab.
        z = jnp.concatenate([logits] * K, axis=0)              # [K*B, 2L]
        g = _gumbel_from_uniform(u_ref[...], scale_ref[...])
        y = z + g                                              # temperature = 1.0
        maxseg = _channel_max(y, 2 * C, D)
        e = jnp.exp(y - maxseg)
        # Per-channel segment-sum (+ re-broadcast) in one MXU op.
        sumseg = jnp.dot(e, segsum_ref[...], preferred_element_type=jnp.float32)
        prob_ref[...] = e / sumseg                             # exact division
        hard = (y == maxseg).astype(jnp.float32)               # one-hot per channel
        hard_ref[...] = hard

        # Decoder(target) straight from registers; dec_w1 is zero-row padded on
        # the host so the estimator half of the slab is ignored.  Renormalize.
        hd = _elu(jnp.dot(hard, dw1_ref[...], preferred_element_type=jnp.float32)
                  + db1_ref[...])
        yd = (jnp.dot(hd, dw2_ref[...], preferred_element_type=jnp.float32)
              + db2_ref[...])
        y_ref[...] = yd * ys_ref[...] + ym_ref[...]

    return kernel


def _make_infer_kernel(K, C, D):
    def kernel(x_ref, u_ref, scale_ref,
               xm_ref, xs_ref, ym_ref, ys_ref,
               sw1_ref, sb1_ref, sw2_ref, sb2_ref,
               dw1_ref, db1_ref, dw2_ref, db2_ref,
               y_ref, hard_ref):
        xn = (x_ref[...] - xm_ref[...]) / xs_ref[...]

        h = _elu(jnp.dot(xn, sw1_ref[...], preferred_element_type=jnp.float32)
                 + sb1_ref[...])
        logits = (jnp.dot(h, sw2_ref[...], preferred_element_type=jnp.float32)
                  + sb2_ref[...])                              # [B, L]

        # Soft probs are discarded by the caller -> skip exp/sum/div entirely.
        z = jnp.concatenate([logits] * K, axis=0)              # [K*B, L]
        g = _gumbel_from_uniform(u_ref[...], scale_ref[...])
        y = z + g
        maxseg = _channel_max(y, C, D)
        hard = (y == maxseg).astype(jnp.float32)
        hard_ref[...] = hard

        hd = _elu(jnp.dot(hard, dw1_ref[...], preferred_element_type=jnp.float32)
                  + db1_ref[...])
        yd = (jnp.dot(hd, dw2_ref[...], preferred_element_type=jnp.float32)
              + db2_ref[...])
        y_ref[...] = yd * ys_ref[...] + ym_ref[...]

    return kernel


# --------------------------------- model -------------------------------------

class PallasModel:
    def __init__(self, params, codebook_channels, codebook_dim):
        self.p = dict(params)
        self.C = codebook_channels
        self.D = codebook_dim

        f32 = jnp.float32
        L = codebook_channels * codebook_dim
        H = params["enc_w2"].shape[0]
        DY = params["y_mean"].shape[1]

        # ----- host-side weight packing (done ONCE) -----
        # layer-1: encoder & estimator both consume xn -> one [DX, 2H] matmul;
        # enc's `tn` contribution goes only to the first H columns (zero pad).
        self.w1x_cat = jnp.concatenate([params["enc_w1_x"], params["est_w1"]], axis=1)
        self.w1t_cat = jnp.concatenate([params["enc_w1_t"],
                                        jnp.zeros((DY, H), f32)], axis=1)
        self.b1_cat = jnp.concatenate([params["enc_b1"], params["est_b1"]], axis=1)
        # layer-2: block-diagonal [2H, 2L] so the heads stay independent.
        top = jnp.concatenate([params["enc_w2"], jnp.zeros((H, L), f32)], axis=1)
        bot = jnp.concatenate([jnp.zeros((H, L), f32), params["est_w2"]], axis=1)
        self.w2_bd = jnp.concatenate([top, bot], axis=0)
        self.b2_cat = jnp.concatenate([params["enc_b2"], params["est_b2"]], axis=1)
        # block-diagonal ones matrix: per-channel segment-sum on the MXU.
        self.segsum2 = jnp.kron(jnp.eye(2 * codebook_channels, dtype=f32),
                                jnp.ones((codebook_dim, codebook_dim), f32))
        # decoder layer-1 padded with zero rows for the estimator half.
        self.dec_w1_pad = jnp.concatenate([params["dec_w1"],
                                           jnp.zeros((L, H), f32)], axis=0)

    def forward(self, x, knn, seed, t=None):
        p = self.p
        C, D = self.C, self.D
        L = C * D
        B = x.shape[0]
        K = int(knn.shape[0])
        DX = p["x_mean"].shape[1]
        DY = p["y_mean"].shape[1]
        H = p["enc_w2"].shape[0]

        # Host-side noise (in-kernel HW PRNG does not lower in interpret mode).
        key = jax.random.PRNGKey(seed)
        scale_col = jnp.repeat(knn.astype(jnp.float32), B)[:, None]   # [K*B, 1]
        vmem = pl.BlockSpec(memory_space=pltpu.MemorySpace.VMEM)

        # NOTE: no grid -> single TensorCore.  At these sizes (tens of rows)
        # that is correct on v5e/v6e/v7x; add a "parallel" batch grid axis only
        # if B*K grows past a few hundred rows (v7x second core).

        if t is not None:
            W = 2 * L
            u = jax.random.uniform(key, (K * B, W), dtype=jnp.float32)
            kernel = _make_train_kernel(K, C, D)
            flops = 2 * (B * DX * 2 * H + B * DY * 2 * H + B * 2 * H * W
                         + K * B * W * W + K * B * W * H + K * B * H * DY)
            transcendentals = 3 * K * B * W + B * 2 * H + K * B * H
            bytes_accessed = 4 * (x.size + t.size + u.size + scale_col.size
                                  + self.w1x_cat.size + self.w1t_cat.size
                                  + self.w2_bd.size + self.segsum2.size
                                  + self.dec_w1_pad.size + p["dec_w2"].size
                                  + K * B * (DY + 2 * W) + B * W)
            out_shape = (
                jax.ShapeDtypeStruct((K * B, DY), jnp.float32),   # y (renormalized)
                jax.ShapeDtypeStruct((B, W), jnp.float32),        # logits  tlog|elog
                jax.ShapeDtypeStruct((K * B, W), jnp.float32),    # probs   tprob|eprob
                jax.ShapeDtypeStruct((K * B, W), jnp.float32),    # hard    thard|ehard
            )
            y, logits, prob, hard = pl.pallas_call(
                kernel,
                out_shape=out_shape,
                in_specs=[vmem] * 18,
                out_specs=(vmem,) * 4,
                cost_estimate=pl.CostEstimate(
                    flops=flops, transcendentals=transcendentals,
                    bytes_accessed=bytes_accessed),
            )(x, t, u, scale_col,
              p["x_mean"], p["x_std"], p["y_mean"], p["y_std"],
              self.w1x_cat, self.w1t_cat, self.b1_cat, self.w2_bd, self.b2_cat,
              self.segsum2, self.dec_w1_pad, p["dec_b1"], p["dec_w2"], p["dec_b2"])
            # host-side split of the fused (enc|est) lane halves
            return (y,
                    logits[:, :L], prob[:, :L], hard[:, :L],
                    logits[:, L:], prob[:, L:], hard[:, L:])
        else:
            u = jax.random.uniform(key, (K * B, L), dtype=jnp.float32)
            kernel = _make_infer_kernel(K, C, D)
            flops = 2 * (B * DX * H + B * H * L + K * B * L * H + K * B * H * DY)
            transcendentals = 2 * K * B * L + B * H + K * B * H
            bytes_accessed = 4 * (x.size + u.size + scale_col.size
                                  + DX * H + H * L + L * H + H * DY
                                  + K * B * (DY + L))
            out_shape = (
                jax.ShapeDtypeStruct((K * B, DY), jnp.float32),   # y (renormalized)
                jax.ShapeDtypeStruct((K * B, L), jnp.float32),    # estimate (hard)
            )
            y, hard = pl.pallas_call(
                kernel,
                out_shape=out_shape,
                in_specs=[vmem] * 15,
                out_specs=(vmem,) * 2,
                cost_estimate=pl.CostEstimate(
                    flops=flops, transcendentals=transcendentals,
                    bytes_accessed=bytes_accessed),
            )(x, u, scale_col,
              p["x_mean"], p["x_std"], p["y_mean"], p["y_std"],
              p["est_w1"], p["est_b1"], p["est_w2"], p["est_b2"],
              p["dec_w1"], p["dec_b1"], p["dec_w2"], p["dec_b2"])
            return (y, hard)


def init_params(key, dx, dy, hidden, latent):
    ks = jax.random.split(key, 11)
    f32 = jnp.float32

    def w(k, shape, scale=0.1):
        return (scale * jax.random.normal(k, shape)).astype(f32)

    return {
        # normalization stats
        "x_mean": w(ks[0], (1, dx)),
        "x_std": (jnp.abs(jax.random.normal(ks[1], (1, dx))) + 0.5).astype(f32),
        "y_mean": w(ks[2], (1, dy)),
        "y_std": (jnp.abs(jax.random.normal(ks[3], (1, dy))) + 0.5).astype(f32),
        # Encoder: cat(t, x) -> hidden -> latent (w1 pre-split into row blocks)
        "enc_w1_t": w(ks[4], (dy, hidden)),
        "enc_w1_x": w(ks[5], (dx, hidden)),
        "enc_b1": jnp.zeros((1, hidden), f32),
        "enc_w2": w(ks[6], (hidden, latent)),
        "enc_b2": jnp.zeros((1, latent), f32),
        # Estimator: dx -> hidden -> latent
        "est_w1": w(ks[7], (dx, hidden)),
        "est_b1": jnp.zeros((1, hidden), f32),
        "est_w2": w(ks[8], (hidden, latent)),
        "est_b2": jnp.zeros((1, latent), f32),
        # Decoder: latent -> hidden -> dy
        "dec_w1": w(ks[9], (latent, hidden)),
        "dec_b1": jnp.zeros((1, hidden), f32),
        "dec_w2": w(ks[10], (hidden, dy)),
        "dec_b2": jnp.zeros((1, dy), f32),
    }


if __name__ == "__main__":
    B, DX, DY, H = 8, 24, 16, 32          # batch kept >= 8 (sublane aligned)
    C, D = 4, 8                           # codebook_channels, codebook_dim
    K = 3                                 # number of knn noise scales
    L = C * D

    root = jax.random.PRNGKey(0)
    kp, kx, kt = jax.random.split(root, 3)

    params = init_params(kp, DX, DY, H, L)
    model = PallasModel(params, C, D)

    x = jax.random.normal(kx, (B, DX), dtype=jnp.float32)
    t = jax.random.normal(kt, (B, DY), dtype=jnp.float32)
    knn = jnp.array([0.3, 0.6, 1.0], dtype=jnp.float32)   # gumbel noise scales

    # training branch (t provided) and inference branch (t=None)
    train_out = model.forward(x, knn, seed=1234, t=t)
    infer_out = model.forward(x, knn, seed=4321)
    jax.block_until_ready(train_out)
    jax.block_until_ready(infer_out)

    (y, target_logits, target_probs, target,
     estimate_logits, estimate_probs, estimate) = train_out
    y_inf, est_inf = infer_out

    # ---- shape checks -------------------------------------------------------
    assert y.shape == (K * B, DY)
    assert target_logits.shape == (B, L)
    assert target_probs.shape == (K * B, L)
    assert target.shape == (K * B, L)
    assert estimate_logits.shape == (B, L)
    assert estimate_probs.shape == (K * B, L)
    assert estimate.shape == (K * B, L)
    assert y_inf.shape == (K * B, DY)
    assert est_inf.shape == (K * B, L)

    # ---- numeric checks against a numpy reference ---------------------------
    p = {k: np.asarray(v).astype(np.float32) for k, v in params.items()}

    def np_elu(h):
        return np.where(h > 0, h, np.exp(np.minimum(h, 0.0)) - 1.0)

    xn_np = (np.asarray(x) - p["x_mean"]) / p["x_std"]
    tn_np = (np.asarray(t) - p["y_mean"]) / p["y_std"]
    tlog_np = (np_elu(tn_np @ p["enc_w1_t"] + xn_np @ p["enc_w1_x"] + p["enc_b1"])
               @ p["enc_w2"] + p["enc_b2"])
    elog_np = (np_elu(xn_np @ p["est_w1"] + p["est_b1"])
               @ p["est_w2"] + p["est_b2"])
    np.testing.assert_allclose(np.asarray(target_logits), tlog_np, rtol=2e-2, atol=2e-2)
    np.testing.assert_allclose(np.asarray(estimate_logits), elog_np, rtol=2e-2, atol=2e-2)

    # full gumbel-softmax reference (same host-generated noise as the wrapper)
    u_np = np.asarray(jax.random.uniform(jax.random.PRNGKey(1234),
                                         (K * B, 2 * L), dtype=jnp.float32))
    scale_np = np.repeat(np.asarray(knn), B)[:, None]
    z_np = np.concatenate([np.concatenate([tlog_np, elog_np], axis=1)] * K, axis=0)
    samples = np.clip(scale_np * (u_np - 0.5) + 0.5, 1e-20, 1.0 - 1e-7)
    yv = (z_np + (-np.log(-np.log(samples + 1e-20) + 1e-20))).astype(np.float32)
    yv_r = yv.reshape(K * B, 2 * C, D)
    ex = np.exp(yv_r - yv_r.max(axis=-1, keepdims=True))
    soft_np = (ex / ex.sum(axis=-1, keepdims=True)).reshape(K * B, 2 * L)
    probs_kernel = np.concatenate([np.asarray(target_probs),
                                   np.asarray(estimate_probs)], axis=1)
    np.testing.assert_allclose(probs_kernel, soft_np, rtol=2e-2, atol=2e-2)

    # decoder + renormalize check, driven by the kernel's own hard sample
    y_np = ((np_elu(np.asarray(target) @ p["dec_w1"] + p["dec_b1"])
             @ p["dec_w2"] + p["dec_b2"]) * p["y_std"] + p["y_mean"])
    np.testing.assert_allclose(np.asarray(y), y_np, rtol=2e-2, atol=2e-2)
    y_inf_np = ((np_elu(np.asarray(est_inf) @ p["dec_w1"] + p["dec_b1"])
                 @ p["dec_w2"] + p["dec_b2"]) * p["y_std"] + p["y_mean"])
    np.testing.assert_allclose(np.asarray(y_inf), y_inf_np, rtol=2e-2, atol=2e-2)

    # hard samples are exact one-hots per codebook channel -> each row sums to C
    np.testing.assert_allclose(np.asarray(target).sum(-1), float(C), atol=0)
    np.testing.assert_allclose(np.asarray(estimate).sum(-1), float(C), atol=0)
    np.testing.assert_allclose(np.asarray(est_inf).sum(-1), float(C), atol=0)
    # soft probabilities sum to C per row (exact division in the softmax)
    np.testing.assert_allclose(np.asarray(target_probs).sum(-1), float(C), atol=5e-3)
    np.testing.assert_allclose(np.asarray(estimate_probs).sum(-1), float(C), atol=5e-3)
    assert np.all(np.isfinite(np.asarray(y)))
    assert np.all(np.isfinite(np.asarray(target_probs)))
    assert np.all(np.isfinite(np.asarray(y_inf)))

    print("KERNEL_OK")
</pallas_src>

<mosaic_0001>
module attributes {stable_mosaic.version = 11 : i64} {
  func.func @kernel(%arg0: memref<8x24xf32, #tpu.memory_space<vmem>>, %arg1: memref<8x16xf32, #tpu.memory_space<vmem>>, %arg2: memref<24x64xf32, #tpu.memory_space<vmem>>, %arg3: memref<24x1xf32, #tpu.memory_space<vmem>>, %arg4: memref<1x24xf32, #tpu.memory_space<vmem>>, %arg5: memref<1x24xf32, #tpu.memory_space<vmem>>, %arg6: memref<1x16xf32, #tpu.memory_space<vmem>>, %arg7: memref<1x16xf32, #tpu.memory_space<vmem>>, %arg8: memref<24x64xf32, #tpu.memory_space<vmem>>, %arg9: memref<16x64xf32, #tpu.memory_space<vmem>>, %arg10: memref<1x64xf32, #tpu.memory_space<vmem>>, %arg11: memref<64x64xf32, #tpu.memory_space<vmem>>, %arg12: memref<1x64xf32, #tpu.memory_space<vmem>>, %arg13: memref<64x64xf32, #tpu.memory_space<vmem>>, %arg14: memref<64x32xf32, #tpu.memory_space<vmem>>, %arg15: memref<1x32xf32, #tpu.memory_space<vmem>>, %arg16: memref<32x16xf32, #tpu.memory_space<vmem>>, %arg17: memref<1x16xf32, #tpu.memory_space<vmem>>, %arg18: memref<24x16xf32, #tpu.memory_space<vmem>>, %arg19: memref<8x64xf32, #tpu.memory_space<vmem>>, %arg20: memref<24x64xf32, #tpu.memory_space<vmem>>, %arg21: memref<24x64xf32, #tpu.memory_space<vmem>>) attributes {dimension_semantics = [], scalar_prefetch = 0 : i64, scratch_operands = 0 : i64, tpu.core_type = #tpu.core_type<tc>} {
    %c0 = arith.constant 0 : index
    %c0_0 = arith.constant 0 : index
    %0 = vector.load %arg0[%c0, %c0_0] : memref<8x24xf32, #tpu.memory_space<vmem>>, vector<8x24xf32>
    %c0_1 = arith.constant 0 : index
    %c0_2 = arith.constant 0 : index
    %1 = vector.load %arg4[%c0_1, %c0_2] : memref<1x24xf32, #tpu.memory_space<vmem>>, vector<1x24xf32>
    %2 = vector.broadcast %1 : vector<1x24xf32> to vector<8x24xf32>
    %3 = arith.subf %0, %2 : vector<8x24xf32>
    %c0_3 = arith.constant 0 : index
    %c0_4 = arith.constant 0 : index
    %4 = vector.load %arg5[%c0_3, %c0_4] : memref<1x24xf32, #tpu.memory_space<vmem>>, vector<1x24xf32>
    %5 = vector.broadcast %4 : vector<1x24xf32> to vector<8x24xf32>
    %6 = arith.divf %3, %5 : vector<8x24xf32>
    %c0_5 = arith.constant 0 : index
    %c0_6 = arith.constant 0 : index
    %7 = vector.load %arg1[%c0_5, %c0_6] : memref<8x16xf32, #tpu.memory_space<vmem>>, vector<8x16xf32>
    %c0_7 = arith.constant 0 : index
    %c0_8 = arith.constant 0 : index
    %8 = vector.load %arg6[%c0_7, %c0_8] : memref<1x16xf32, #tpu.memory_space<vmem>>, vector<1x16xf32>
    %9 = vector.broadcast %8 : vector<1x16xf32> to vector<8x16xf32>
    %10 = arith.subf %7, %9 : vector<8x16xf32>
    %c0_9 = arith.constant 0 : index
    %c0_10 = arith.constant 0 : index
    %11 = vector.load %arg7[%c0_9, %c0_10] : memref<1x16xf32, #tpu.memory_space<vmem>>, vector<1x16xf32>
    %12 = vector.broadcast %11 : vector<1x16xf32> to vector<8x16xf32>
    %13 = arith.divf %10, %12 : vector<8x16xf32>
    %c0_11 = arith.constant 0 : index
    %c0_12 = arith.constant 0 : index
    %14 = vector.load %arg8[%c0_11, %c0_12] : memref<24x64xf32, #tpu.memory_space<vmem>>, vector<24x64xf32>
    %cst = arith.constant dense<0.000000e+00> : vector<8x64xf32>
    %15 = tpu.matmul %6, %14, %cst {dimension_numbers = #tpu.dot_dimension_numbers<[1], [0], [0], [1], [0, 0, 1, 1], [], []>} : vector<8x24xf32>, vector<24x64xf32>, vector<8x64xf32> -> vector<8x64xf32>
    %c0_13 = arith.constant 0 : index
    %c0_14 = arith.constant 0 : index
    %16 = vector.load %arg9[%c0_13, %c0_14] : memref<16x64xf32, #tpu.memory_space<vmem>>, vector<16x64xf32>
    %cst_15 = arith.constant dense<0.000000e+00> : vector<8x64xf32>
    %17 = tpu.matmul %13, %16, %cst_15 {dimension_numbers = #tpu.dot_dimension_numbers<[1], [0], [0], [1], [0, 0, 1, 1], [], []>} : vector<8x16xf32>, vector<16x64xf32>, vector<8x64xf32> -> vector<8x64xf32>
    %18 = arith.addf %15, %17 : vector<8x64xf32>
    %c0_16 = arith.constant 0 : index
    %c0_17 = arith.constant 0 : index
    %19 = vector.load %arg10[%c0_16, %c0_17] : memref<1x64xf32, #tpu.memory_space<vmem>>, vector<1x64xf32>
    %20 = vector.broadcast %19 : vector<1x64xf32> to vector<8x64xf32>
    %21 = arith.addf %18, %20 : vector<8x64xf32>
    %cst_18 = arith.constant 0.000000e+00 : f32
    %22 = vector.broadcast %cst_18 : f32 to vector<8x64xf32>
    %23 = arith.cmpf ogt, %21, %22 : vector<8x64xf32>
    %cst_19 = arith.constant 0.000000e+00 : f32
    %24 = vector.broadcast %cst_19 : f32 to vector<8x64xf32>
    %25 = arith.minimumf %21, %24 : vector<8x64xf32>
    %26 = math.exp %25 : vector<8x64xf32>
    %cst_20 = arith.constant 1.000000e+00 : f32
    %27 = vector.broadcast %cst_20 : f32 to vector<8x64xf32>
    %28 = arith.subf %26, %27 : vector<8x64xf32>
    %29 = arith.select %23, %21, %28 : vector<8x64xi1>, vector<8x64xf32>
    %c0_21 = arith.constant 0 : index
    %c0_22 = arith.constant 0 : index
    %30 = vector.load %arg11[%c0_21, %c0_22] : memref<64x64xf32, #tpu.memory_space<vmem>>, vector<64x64xf32>
    %cst_23 = arith.constant dense<0.000000e+00> : vector<8x64xf32>
    %31 = tpu.matmul %29, %30, %cst_23 {dimension_numbers = #tpu.dot_dimension_numbers<[1], [0], [0], [1], [0, 0, 1, 1], [], []>} : vector<8x64xf32>, vector<64x64xf32>, vector<8x64xf32> -> vector<8x64xf32>
    %c0_24 = arith.constant 0 : index
    %c0_25 = arith.constant 0 : index
    %32 = vector.load %arg12[%c0_24, %c0_25] : memref<1x64xf32, #tpu.memory_space<vmem>>, vector<1x64xf32>
    %33 = vector.broadcast %32 : vector<1x64xf32> to vector<8x64xf32>
    %34 = arith.addf %31, %33 : vector<8x64xf32>
    %c0_26 = arith.constant 0 : index
    %c0_27 = arith.constant 0 : index
    %35 = vector.load %arg19[%c0_26, %c0_27] : memref<8x64xf32, #tpu.memory_space<vmem>>, vector<8x64xf32>
    tpu.vector_store %arg19[%c0_26, %c0_27], %34 {strides = array<i32>} : memref<8x64xf32, #tpu.memory_space<vmem>>, vector<8x64xf32>,
    %36 = tpu.concatenate %34, %34, %34 in 0 : vector<8x64xf32>, vector<8x64xf32>, vector<8x64xf32> -> vector<24x64xf32>
    %c0_28 = arith.constant 0 : index
    %c0_29 = arith.constant 0 : index
    %37 = vector.load %arg2[%c0_28, %c0_29] : memref<24x64xf32, #tpu.memory_space<vmem>>, vector<24x64xf32>
    %c0_30 = arith.constant 0 : index
    %c0_31 = arith.constant 0 : index
    %38 = vector.load %arg3[%c0_30, %c0_31] : memref<24x1xf32, #tpu.memory_space<vmem>>, vector<24x1xf32>
    %cst_32 = arith.constant 5.000000e-01 : f32
    %39 = vector.broadcast %cst_32 : f32 to vector<24x64xf32>
    %40 = arith.subf %37, %39 : vector<24x64xf32>
    %41 = vector.broadcast %38 : vector<24x1xf32> to vector<24x64xf32>
    %42 = arith.mulf %41, %40 : vector<24x64xf32>
    %cst_33 = arith.constant 5.000000e-01 : f32
    %43 = vector.broadcast %cst_33 : f32 to vector<24x64xf32>
    %44 = arith.addf %42, %43 : vector<24x64xf32>
    %cst_34 = arith.constant 9.99999968E-21 : f32
    %cst_35 = arith.constant 0.99999988 : f32
    %45 = vector.broadcast %cst_34 : f32 to vector<24x64xf32>
    %46 = arith.maximumf %45, %44 : vector<24x64xf32>
    %47 = vector.broadcast %cst_35 : f32 to vector<24x64xf32>
    %48 = arith.minimumf %47, %46 : vector<24x64xf32>
    %cst_36 = arith.constant 9.99999968E-21 : f32
    %49 = vector.broadcast %cst_36 : f32 to vector<24x64xf32>
    %50 = arith.addf %48, %49 : vector<24x64xf32>
    %51 = math.log %50 : vector<24x64xf32>
    %cst_37 = arith.constant 0.000000e+00 : f32
    %52 = vector.broadcast %cst_37 : f32 to vector<24x64xf32>
    %53 = arith.subf %52, %51 : vector<24x64xf32>
    %cst_38 = arith.constant 9.99999968E-21 : f32
    %54 = vector.broadcast %cst_38 : f32 to vector<24x64xf32>
    %55 = arith.addf %53, %54 : vector<24x64xf32>
    %56 = math.log %55 : vector<24x64xf32>
    %cst_39 = arith.constant 0.000000e+00 : f32
    %57 = vector.broadcast %cst_39 : f32 to vector<24x64xf32>
    %58 = arith.subf %57, %56 : vector<24x64xf32>
    %59 = arith.addf %36, %58 : vector<24x64xf32>
    %60 = tpu.iota {dimensions = array<i32: 1>} : vector<24x64xi32>
    %cst_40 = arith.constant 0.000000e+00 : f32
    %61 = vector.broadcast %cst_40 : f32 to vector<24x64xf32>
    %c0_i32 = arith.constant 0 : i32
    %62 = vector.broadcast %c0_i32 : i32 to vector<24x64xi32>
    %63 = arith.cmpi sge, %60, %62 : vector<24x64xi32>
    %c8_i32 = arith.constant 8 : i32
    %64 = vector.broadcast %c8_i32 : i32 to vector<24x64xi32>
    %65 = arith.cmpi slt, %60, %64 : vector<24x64xi32>
    %66 = arith.andi %63, %65 : vector<24x64xi1>
    %cst_41 = arith.constant 0xFF800000 : f32
    %67 = vector.broadcast %cst_41 : f32 to vector<24x64xf32>
    %68 = arith.select %66, %59, %67 : vector<24x64xi1>, vector<24x64xf32>
    %cst_42 = arith.constant dense<0xFF800000> : vector<24xf32>
    %69 = vector.multi_reduction <maximumf>, %68, %cst_42 [1] : vector<24x64xf32> to vector<24xf32>
    %70 = vector.shape_cast %69 : vector<24xf32> to vector<24x1xf32>
    %71 = vector.shape_cast %70 : vector<24x1xf32> to vector<24x1xf32>
    %72 = vector.broadcast %71 : vector<24x1xf32> to vector<24x64xf32>
    %73 = arith.select %66, %72, %61 : vector<24x64xi1>, vector<24x64xf32>
    %c8_i32_43 = arith.constant 8 : i32
    %74 = vector.broadcast %c8_i32_43 : i32 to vector<24x64xi32>
    %75 = arith.cmpi sge, %60, %74 : vector<24x64xi32>
    %c16_i32 = arith.constant 16 : i32
    %76 = vector.broadcast %c16_i32 : i32 to vector<24x64xi32>
    %77 = arith.cmpi slt, %60, %76 : vector<24x64xi32>
    %78 = arith.andi %75, %77 : vector<24x64xi1>
    %cst_44 = arith.constant 0xFF800000 : f32
    %79 = vector.broadcast %cst_44 : f32 to vector<24x64xf32>
    %80 = arith.select %78, %59, %79 : vector<24x64xi1>, vector<24x64xf32>
    %cst_45 = arith.constant dense<0xFF800000> : vector<24xf32>
    %81 = vector.multi_reduction <maximumf>, %80, %cst_45 [1] : vector<24x64xf32> to vector<24xf32>
    %82 = vector.shape_cast %81 : vector<24xf32> to vector<24x1xf32>
    %83 = vector.shape_cast %82 : vector<24x1xf32> to vector<24x1xf32>
    %84 = vector.broadcast %83 : vector<24x1xf32> to vector<24x64xf32>
    %85 = arith.select %78, %84, %73 : vector<24x64xi1>, vector<24x64xf32>
    %c16_i32_46 = arith.constant 16 : i32
    %86 = vector.broadcast %c16_i32_46 : i32 to vector<24x64xi32>
    %87 = arith.cmpi sge, %60, %86 : vector<24x64xi32>
    %c24_i32 = arith.constant 24 : i32
    %88 = vector.broadcast %c24_i32 : i32 to vector<24x64xi32>
    %89 = arith.cmpi slt, %60, %88 : vector<24x64xi32>
    %90 = arith.andi %87, %89 : vector<24x64xi1>
    %cst_47 = arith.constant 0xFF800000 : f32
    %91 = vector.broadcast %cst_47 : f32 to vector<24x64xf32>
    %92 = arith.select %90, %59, %91 : vector<24x64xi1>, vector<24x64xf32>
    %cst_48 = arith.constant dense<0xFF800000> : vector<24xf32>
    %93 = vector.multi_reduction <maximumf>, %92, %cst_48 [1] : vector<24x64xf32> to vector<24xf32>
    %94 = vector.shape_cast %93 : vector<24xf32> to vector<24x1xf32>
    %95 = vector.shape_cast %94 : vector<24x1xf32> to vector<24x1xf32>
    %96 = vector.broadcast %95 : vector<24x1xf32> to vector<24x64xf32>
    %97 = arith.select %90, %96, %85 : vector<24x64xi1>, vector<24x64xf32>
    %c24_i32_49 = arith.constant 24 : i32
    %98 = vector.broadcast %c24_i32_49 : i32 to vector<24x64xi32>
    %99 = arith.cmpi sge, %60, %98 : vector<24x64xi32>
    %c32_i32 = arith.constant 32 : i32
    %100 = vector.broadcast %c32_i32 : i32 to vector<24x64xi32>
    %101 = arith.cmpi slt, %60, %100 : vector<24x64xi32>
    %102 = arith.andi %99, %101 : vector<24x64xi1>
    %cst_50 = arith.constant 0xFF800000 : f32
    %103 = vector.broadcast %cst_50 : f32 to vector<24x64xf32>
    %104 = arith.select %102, %59, %103 : vector<24x64xi1>, vector<24x64xf32>
    %cst_51 = arith.constant dense<0xFF800000> : vector<24xf32>
    %105 = vector.multi_reduction <maximumf>, %104, %cst_51 [1] : vector<24x64xf32> to vector<24xf32>
    %106 = vector.shape_cast %105 : vector<24xf32> to vector<24x1xf32>
    %107 = vector.shape_cast %106 : vector<24x1xf32> to vector<24x1xf32>
    %108 = vector.broadcast %107 : vector<24x1xf32> to vector<24x64xf32>
    %109 = arith.select %102, %108, %97 : vector<24x64xi1>, vector<24x64xf32>
    %c32_i32_52 = arith.constant 32 : i32
    %110 = vector.broadcast %c32_i32_52 : i32 to vector<24x64xi32>
    %111 = arith.cmpi sge, %60, %110 : vector<24x64xi32>
    %c40_i32 = arith.constant 40 : i32
    %112 = vector.broadcast %c40_i32 : i32 to vector<24x64xi32>
    %113 = arith.cmpi slt, %60, %112 : vector<24x64xi32>
    %114 = arith.andi %111, %113 : vector<24x64xi1>
    %cst_53 = arith.constant 0xFF800000 : f32
    %115 = vector.broadcast %cst_53 : f32 to vector<24x64xf32>
    %116 = arith.select %114, %59, %115 : vector<24x64xi1>, vector<24x64xf32>
    %cst_54 = arith.constant dense<0xFF800000> : vector<24xf32>
    %117 = vector.multi_reduction <maximumf>, %116, %cst_54 [1] : vector<24x64xf32> to vector<24xf32>
    %118 = vector.shape_cast %117 : vector<24xf32> to vector<24x1xf32>
    %119 = vector.shape_cast %118 : vector<24x1xf32> to vector<24x1xf32>
    %120 = vector.broadcast %119 : vector<24x1xf32> to vector<24x64xf32>
    %121 = arith.select %114, %120, %109 : vector<24x64xi1>, vector<24x64xf32>
    %c40_i32_55 = arith.constant 40 : i32
    %122 = vector.broadcast %c40_i32_55 : i32 to vector<24x64xi32>
    %123 = arith.cmpi sge, %60, %122 : vector<24x64xi32>
    %c48_i32 = arith.constant 48 : i32
    %124 = vector.broadcast %c48_i32 : i32 to vector<24x64xi32>
    %125 = arith.cmpi slt, %60, %124 : vector<24x64xi32>
    %126 = arith.andi %123, %125 : vector<24x64xi1>
    %cst_56 = arith.constant 0xFF800000 : f32
    %127 = vector.broadcast %cst_56 : f32 to vector<24x64xf32>
    %128 = arith.select %126, %59, %127 : vector<24x64xi1>, vector<24x64xf32>
    %cst_57 = arith.constant dense<0xFF800000> : vector<24xf32>
    %129 = vector.multi_reduction <maximumf>, %128, %cst_57 [1] : vector<24x64xf32> to vector<24xf32>
    %130 = vector.shape_cast %129 : vector<24xf32> to vector<24x1xf32>
    %131 = vector.shape_cast %130 : vector<24x1xf32> to vector<24x1xf32>
    %132 = vector.broadcast %131 : vector<24x1xf32> to vector<24x64xf32>
    %133 = arith.select %126, %132, %121 : vector<24x64xi1>, vector<24x64xf32>
    %c48_i32_58 = arith.constant 48 : i32
    %134 = vector.broadcast %c48_i32_58 : i32 to vector<24x64xi32>
    %135 = arith.cmpi sge, %60, %134 : vector<24x64xi32>
    %c56_i32 = arith.constant 56 : i32
    %136 = vector.broadcast %c56_i32 : i32 to vector<24x64xi32>
    %137 = arith.cmpi slt, %60, %136 : vector<24x64xi32>
    %138 = arith.andi %135, %137 : vector<24x64xi1>
    %cst_59 = arith.constant 0xFF800000 : f32
    %139 = vector.broadcast %cst_59 : f32 to vector<24x64xf32>
    %140 = arith.select %138, %59, %139 : vector<24x64xi1>, vector<24x64xf32>
    %cst_60 = arith.constant dense<0xFF800000> : vector<24xf32>
    %141 = vector.multi_reduction <maximumf>, %140, %cst_60 [1] : vector<24x64xf32> to vector<24xf32>
    %142 = vector.shape_cast %141 : vector<24xf32> to vector<24x1xf32>
    %143 = vector.shape_cast %142 : vector<24x1xf32> to vector<24x1xf32>
    %144 = vector.broadcast %143 : vector<24x1xf32> to vector<24x64xf32>
    %145 = arith.select %138, %144, %133 : vector<24x64xi1>, vector<24x64xf32>
    %c56_i32_61 = arith.constant 56 : i32
    %146 = vector.broadcast %c56_i32_61 : i32 to vector<24x64xi32>
    %147 = arith.cmpi sge, %60, %146 : vector<24x64xi32>
    %c64_i32 = arith.constant 64 : i32
    %148 = vector.broadcast %c64_i32 : i32 to vector<24x64xi32>
    %149 = arith.cmpi slt, %60, %148 : vector<24x64xi32>
    %150 = arith.andi %147, %149 : vector<24x64xi1>
    %cst_62 = arith.constant 0xFF800000 : f32
    %151 = vector.broadcast %cst_62 : f32 to vector<24x64xf32>
    %152 = arith.select %150, %59, %151 : vector<24x64xi1>, vector<24x64xf32>
    %cst_63 = arith.constant dense<0xFF800000> : vector<24xf32>
    %153 = vector.multi_reduction <maximumf>, %152, %cst_63 [1] : vector<24x64xf32> to vector<24xf32>
    %154 = vector.shape_cast %153 : vector<24xf32> to vector<24x1xf32>
    %155 = vector.shape_cast %154 : vector<24x1xf32> to vector<24x1xf32>
    %156 = vector.broadcast %155 : vector<24x1xf32> to vector<24x64xf32>
    %157 = arith.select %150, %156, %145 : vector<24x64xi1>, vector<24x64xf32>
    %158 = arith.subf %59, %157 : vector<24x64xf32>
    %159 = math.exp %158 : vector<24x64xf32>
    %c0_64 = arith.constant 0 : index
    %c0_65 = arith.constant 0 : index
    %160 = vector.load %arg13[%c0_64, %c0_65] : memref<64x64xf32, #tpu.memory_space<vmem>>, vector<64x64xf32>
    %cst_66 = arith.constant dense<0.000000e+00> : vector<24x64xf32>
    %161 = tpu.matmul %159, %160, %cst_66 {dimension_numbers = #tpu.dot_dimension_numbers<[1], [0], [0], [1], [0, 0, 1, 1], [], []>} : vector<24x64xf32>, vector<64x64xf32>, vector<24x64xf32> -> vector<24x64xf32>
    %162 = arith.divf %159, %161 : vector<24x64xf32>
    %c0_67 = arith.constant 0 : index
    %c0_68 = arith.constant 0 : index
    %163 = vector.load %arg20[%c0_67, %c0_68] : memref<24x64xf32, #tpu.memory_space<vmem>>, vector<24x64xf32>
    tpu.vector_store %arg20[%c0_67, %c0_68], %162 {strides = array<i32>} : memref<24x64xf32, #tpu.memory_space<vmem>>, vector<24x64xf32>,
    %164 = arith.cmpf oeq, %59, %157 : vector<24x64xf32>
    %165 = arith.extui %164 : vector<24x64xi1> to vector<24x64xi32>
    %166 = arith.sitofp %165 : vector<24x64xi32> to vector<24x64xf32>
    %c0_69 = arith.constant 0 : index
    %c0_70 = arith.constant 0 : index
    %167 = vector.load %arg21[%c0_69, %c0_70] : memref<24x64xf32, #tpu.memory_space<vmem>>, vector<24x64xf32>
    tpu.vector_store %arg21[%c0_69, %c0_70], %166 {strides = array<i32>} : memref<24x64xf32, #tpu.memory_space<vmem>>, vector<24x64xf32>,
    %c0_71 = arith.constant 0 : index
    %c0_72 = arith.constant 0 : index
    %168 = vector.load %arg14[%c0_71, %c0_72] : memref<64x32xf32, #tpu.memory_space<vmem>>, vector<64x32xf32>
    %cst_73 = arith.constant dense<0.000000e+00> : vector<24x32xf32>
    %169 = tpu.matmul %166, %168, %cst_73 {dimension_numbers = #tpu.dot_dimension_numbers<[1], [0], [0], [1], [0, 0, 1, 1], [], []>} : vector<24x64xf32>, vector<64x32xf32>, vector<24x32xf32> -> vector<24x32xf32>
    %c0_74 = arith.constant 0 : index
    %c0_75 = arith.constant 0 : index
    %170 = vector.load %arg15[%c0_74, %c0_75] : memref<1x32xf32, #tpu.memory_space<vmem>>, vector<1x32xf32>
    %171 = vector.broadcast %170 : vector<1x32xf32> to vector<24x32xf32>
    %172 = arith.addf %169, %171 : vector<24x32xf32>
    %cst_76 = arith.constant 0.000000e+00 : f32
    %173 = vector.broadcast %cst_76 : f32 to vector<24x32xf32>
    %174 = arith.cmpf ogt, %172, %173 : vector<24x32xf32>
    %cst_77 = arith.constant 0.000000e+00 : f32
    %175 = vector.broadcast %cst_77 : f32 to vector<24x32xf32>
    %176 = arith.minimumf %172, %175 : vector<24x32xf32>
    %177 = math.exp %176 : vector<24x32xf32>
    %cst_78 = arith.constant 1.000000e+00 : f32
    %178 = vector.broadcast %cst_78 : f32 to vector<24x32xf32>
    %179 = arith.subf %177, %178 : vector<24x32xf32>
    %180 = arith.select %174, %172, %179 : vector<24x32xi1>, vector<24x32xf32>
    %c0_79 = arith.constant 0 : index
    %c0_80 = arith.constant 0 : index
    %181 = vector.load %arg16[%c0_79, %c0_80] : memref<32x16xf32, #tpu.memory_space<vmem>>, vector<32x16xf32>
    %cst_81 = arith.constant dense<0.000000e+00> : vector<24x16xf32>
    %182 = tpu.matmul %180, %181, %cst_81 {dimension_numbers = #tpu.dot_dimension_numbers<[1], [0], [0], [1], [0, 0, 1, 1], [], []>} : vector<24x32xf32>, vector<32x16xf32>, vector<24x16xf32> -> vector<24x16xf32>
    %c0_82 = arith.constant 0 : index
    %c0_83 = arith.constant 0 : index
    %183 = vector.load %arg17[%c0_82, %c0_83] : memref<1x16xf32, #tpu.memory_space<vmem>>, vector<1x16xf32>
    %184 = vector.broadcast %183 : vector<1x16xf32> to vector<24x16xf32>
    %185 = arith.addf %182, %184 : vector<24x16xf32>
    %c0_84 = arith.constant 0 : index
    %c0_85 = arith.constant 0 : index
    %186 = vector.load %arg7[%c0_84, %c0_85] : memref<1x16xf32, #tpu.memory_space<vmem>>, vector<1x16xf32>
    %187 = vector.broadcast %186 : vector<1x16xf32> to vector<24x16xf32>
    %188 = arith.mulf %185, %187 : vector<24x16xf32>
    %c0_86 = arith.constant 0 : index
    %c0_87 = arith.constant 0 : index
    %189 = vector.load %arg6[%c0_86, %c0_87] : memref<1x16xf32, #tpu.memory_space<vmem>>, vector<1x16xf32>
    %190 = vector.broadcast %189 : vector<1x16xf32> to vector<24x16xf32>
    %191 = arith.addf %188, %190 : vector<24x16xf32>
    %c0_88 = arith.constant 0 : index
    %c0_89 = arith.constant 0 : index
    %192 = vector.load %arg18[%c0_88, %c0_89] : memref<24x16xf32, #tpu.memory_space<vmem>>, vector<24x16xf32>
    tpu.vector_store %arg18[%c0_88, %c0_89], %191 {strides = array<i32>} : memref<24x16xf32, #tpu.memory_space<vmem>>, vector<24x16xf32>,
    return
  }
}

</mosaic_0001>

<llo_original>
// kernel: tpu_custom_call.1
$region0: #{tpu_custom_call.1}
  #allocation0 [shape = 'u32[]', space=smem, size = 0x4, offset = 0x4, fixed_abs, tag = 'smem constant byte address 0x4 - core index']
  #allocation1 [shape = 'u32[72,128]{1,0:T(1,128)}', space=vmem, size = 0x9000, scoped, tag = 'internal scratch']
  %s0 = inlined_call_operand.hbm [shape: f32[8,24], index: 0, kind: input, shape index: {}]
  %s1 = inlined_call_operand.hbm [shape: f32[8,16], index: 1, kind: input, shape index: {}]
  %s2 = inlined_call_operand.hbm [shape: f32[24,64], index: 2, kind: input, shape index: {}]
  %s3 = inlined_call_operand.vmem [shape: f32[24,1], index: 3, kind: input, shape index: {}]
  %s4 = inlined_call_operand.hbm [shape: f32[1,24], index: 4, kind: input, shape index: {}]
  %s5 = inlined_call_operand.hbm [shape: f32[1,24], index: 5, kind: input, shape index: {}]
  %s6 = inlined_call_operand.hbm [shape: f32[1,16], index: 6, kind: input, shape index: {}]
  %s7 = inlined_call_operand.hbm [shape: f32[1,16], index: 7, kind: input, shape index: {}]
  %s8 = inlined_call_operand.hbm [shape: f32[24,64], index: 8, kind: input, shape index: {}]
  %s9 = inlined_call_operand.vmem [shape: f32[16,64], index: 9, kind: input, shape index: {}]
  %s10 = inlined_call_operand.vmem [shape: f32[1,64], index: 10, kind: input, shape index: {}]
  %s11 = inlined_call_operand.vmem [shape: f32[64,64], index: 11, kind: input, shape index: {}]
  %s12 = inlined_call_operand.vmem [shape: f32[1,64], index: 12, kind: input, shape index: {}]
  %s13 = inlined_call_operand.vmem [shape: f32[64,64], index: 13, kind: input, shape index: {}]
  %s14 = inlined_call_operand.vmem [shape: f32[64,32], index: 14, kind: input, shape index: {}]
  %s15 = inlined_call_operand.vmem [shape: f32[1,32], index: 15, kind: input, shape index: {}]
  %s16 = inlined_call_operand.vmem [shape: f32[32,16], index: 16, kind: input, shape index: {}]
  %s17 = inlined_call_operand.vmem [shape: f32[1,16], index: 17, kind: input, shape index: {}]
  %s18 = inlined_call_operand.vmem [shape: f32[24,16], index: 18, kind: output, shape index: {0}]
  %s19 = inlined_call_operand.hbm [shape: f32[8,64], index: 19, kind: output, shape index: {1}]
  %s20 = inlined_call_operand.hbm [shape: f32[24,64], index: 20, kind: output, shape index: {2}]
  %s21 = inlined_call_operand.hbm [shape: f32[24,64], index: 21, kind: output, shape index: {3}]
  %22 = xla_tuple %s18, %s19, %s20, %s21
  %s23 = sld [smem:[#allocation0]]
  $region138: #{tpu_custom_call.1} parent=0
    _
  %s25 = ssub.s32 1, %s23
  %s26 = scalar_select 0, %s25, %s23
  $region1: #{tpu_custom_call.1} parent=0
    #allocation2 [shape = 'u8[4096]{0}', space=vmem, size = 0x1000, scoped, tag = 'input window, operand 0, single buffered']
    #allocation3 [shape = 's32[1]{0}', space=sflag, size = 0x4, scoped, tag = 'scoped memory for tpu_custom_call.1']
    #allocation4 [shape = 's32[1]{0}', space=sflag, size = 0x4, scoped, tag = 'scoped memory for tpu_custom_call.1']
    #allocation5 [shape = 'u8[4096]{0}', space=vmem, size = 0x1000, scoped, tag = 'input window, operand 1, single buffered']
    #allocation6 [shape = 's32[1]{0}', space=sflag, size = 0x4, scoped, tag = 'scoped memory for tpu_custom_call.1']
    #allocation7 [shape = 'u8[12288]{0}', space=vmem, size = 0x3000, scoped, tag = 'input window, operand 2, single buffered']
    #allocation8 [shape = 'u8[512]{0}', space=vmem, size = 0x400, scoped, tag = 'input window, operand 4, single buffered']
    #allocation9 [shape = 's32[1]{0}', space=sflag, size = 0x4, scoped, tag = 'scoped memory for tpu_custom_call.1']
    #allocation10 [shape = 'u8[512]{0}', space=vmem, size = 0x400, scoped, tag = 'input window, operand 5, single buffered']
    #allocation11 [shape = 'u8[512]{0}', space=vmem, size = 0x400, scoped, tag = 'input window, operand 6, single buffered']
    #allocation12 [shape = 's32[1]{0}', space=sflag, size = 0x4, scoped, tag = 'scoped memory for tpu_custom_call.1']
    #allocation13 [shape = 'u8[512]{0}', space=vmem, size = 0x400, scoped, tag = 'input window, operand 7, single buffered']
    #allocation14 [shape = 'u8[12288]{0}', space=vmem, size = 0x3000, scoped, tag = 'input window, operand 8, single buffered']
    #allocation15 [shape = 's32[1]{0}', space=sflag, size = 0x4, scoped, tag = 'scoped memory for tpu_custom_call.1']
    #allocation16 [shape = 'u8[4096]{0}', space=vmem, size = 0x1000, scoped, tag = 'output window, operand 1, single buffered']
    #allocation17 [shape = 'u8[12288]{0}', space=vmem, size = 0x3000, scoped, tag = 'output window, operand 2, single buffered']
    #allocation18 [shape = 's32[1]{0}', space=sflag, size = 0x4, scoped, tag = 'scoped memory for tpu_custom_call.1']
    #allocation19 [shape = 'u8[12288]{0}', space=vmem, size = 0x3000, scoped, tag = 'output window, operand 3, single buffered']
    %27 = vsyncpa [#allocation3], 0
    %28 = vsyncpa [#allocation6], 0
    %29 = vsyncpa [#allocation9], 0
    %30 = vsyncpa [#allocation12], 0
    %31 = vsyncpa [#allocation15], 0
    %32 = vsyncpa [#allocation4], 0
    %33 = vsyncpa [#allocation18], 0
    // Predicated region
    $region2: #{tpu_custom_call.1} parent=1 // pred_check
      _
    $region3: #{tpu_custom_call.1} parent=1 // pred_check_branch
      %35 = sbr.rel (0) target = $region5
    $region4: #{tpu_custom_call.1} parent=1 // pred_region
      %37 = vsyncadd [#allocation3], 0
      %s39 = sshll.u32 %s0, 4
      %s40 = int_to_ptr.hbm [resolvable:$true] %s39
      %s41 = sshll.u32 [#allocation2], 4
      %s42 = int_to_ptr.vmem [resolvable:$true] %s41
      %44 = dma.hbm_to_vmem [thread:$0]  %s40, 128, %s42, [#allocation3]
    $region5: #{tpu_custom_call.1} parent=1 // pred_fallthru
      _
    // Predicated region
    $region6: #{tpu_custom_call.1} parent=1 // pred_check
      _
    $region7: #{tpu_custom_call.1} parent=1 // pred_check_branch
      %46 = sbr.rel (0) target = $region9
    $region8: #{tpu_custom_call.1} parent=1 // pred_region
      %48 = vsyncadd [#allocation6], 0
      %s50 = sshll.u32 %s1, 4
      %s51 = int_to_ptr.hbm [resolvable:$true] %s50
      %s52 = sshll.u32 [#allocation5], 4
      %s53 = int_to_ptr.vmem [resolvable:$true] %s52
      %55 = dma.hbm_to_vmem [thread:$0]  %s51, 128, %s53, [#allocation6]
    $region9: #{tpu_custom_call.1} parent=1 // pred_fallthru
      _
    // Predicated region
    $region10: #{tpu_custom_call.1} parent=1 // pred_check
      _
    $region11: #{tpu_custom_call.1} parent=1 // pred_check_branch
      %57 = sbr.rel (0) target = $region13
    $region12: #{tpu_custom_call.1} parent=1 // pred_region
      %59 = vsyncadd [#allocation6], 0
      %s60 = sshll.u32 %s2, 4
      %s61 = int_to_ptr.hbm [resolvable:$true] %s60
      %s62 = sshll.u32 [#allocation7], 4
      %s63 = int_to_ptr.vmem [resolvable:$true] %s62
      %68 = dma.hbm_to_vmem [thread:$0]  %s61, 384, %s63, [#allocation6], 128, 128, 8
    $region13: #{tpu_custom_call.1} parent=1 // pred_fallthru
      _
    // Predicated region
    $region14: #{tpu_custom_call.1} parent=1 // pred_check
      _
    $region15: #{tpu_custom_call.1} parent=1 // pred_check_branch
      %70 = sbr.rel (0) target = $region17
    $region16: #{tpu_custom_call.1} parent=1 // pred_region
      _
    $region17: #{tpu_custom_call.1} parent=1 // pred_fallthru
      _
    // Predicated region
    $region18: #{tpu_custom_call.1} parent=1 // pred_check
      _
    $region19: #{tpu_custom_call.1} parent=1 // pred_check_branch
      %72 = sbr.rel (0) target = $region21
    $region20: #{tpu_custom_call.1} parent=1 // pred_region
      %74 = vsyncadd [#allocation9], 0
      %s76 = sshll.u32 %s4, 4
      %s77 = int_to_ptr.hbm [resolvable:$true] %s76
      %s78 = sshll.u32 [#allocation8], 4
      %s79 = int_to_ptr.vmem [resolvable:$true] %s78
      %81 = dma.hbm_to_vmem [thread:$0]  %s77, 16, %s79, [#allocation9]
    $region21: #{tpu_custom_call.1} parent=1 // pred_fallthru
      _
    // Predicated region
    $region22: #{tpu_custom_call.1} parent=1 // pred_check
      _
    $region23: #{tpu_custom_call.1} parent=1 // pred_check_branch
      %83 = sbr.rel (0) target = $region25
    $region24: #{tpu_custom_call.1} parent=1 // pred_region
      %85 = vsyncadd [#allocation9], 0
      %s87 = sshll.u32 %s5, 4
      %s88 = int_to_ptr.hbm [resolvable:$true] %s87
      %s89 = sshll.u32 [#allocation10], 4
      %s90 = int_to_ptr.vmem [resolvable:$true] %s89
      %92 = dma.hbm_to_vmem [thread:$0]  %s88, 16, %s90, [#allocation9]
    $region25: #{tpu_custom_call.1} parent=1 // pred_fallthru
      _
    // Predicated region
    $region26: #{tpu_custom_call.1} parent=1 // pred_check
      _
    $region27: #{tpu_custom_call.1} parent=1 // pred_check_branch
      %94 = sbr.rel (0) target = $region29
    $region28: #{tpu_custom_call.1} parent=1 // pred_region
      %96 = vsyncadd [#allocation12], 0
      %s98 = sshll.u32 %s6, 4
      %s99 = int_to_ptr.hbm [resolvable:$true] %s98
      %s100 = sshll.u32 [#allocation11], 4
      %s101 = int_to_ptr.vmem [resolvable:$true] %s100
      %103 = dma.hbm_to_vmem [thread:$0]  %s99, 16, %s101, [#allocation12]
    $region29: #{tpu_custom_call.1} parent=1 // pred_fallthru
      _
    // Predicated region
    $region30: #{tpu_custom_call.1} parent=1 // pred_check
      _
    $region31: #{tpu_custom_call.1} parent=1 // pred_check_branch
      %105 = sbr.rel (0) target = $region33
    $region32: #{tpu_custom_call.1} parent=1 // pred_region
      %107 = vsyncadd [#allocation12], 0
      %s109 = sshll.u32 %s7, 4
      %s110 = int_to_ptr.hbm [resolvable:$true] %s109
      %s111 = sshll.u32 [#allocation13], 4
      %s112 = int_to_ptr.vmem [resolvable:$true] %s111
      %114 = dma.hbm_to_vmem [thread:$0]  %s110, 16, %s112, [#allocation12]
    $region33: #{tpu_custom_call.1} parent=1 // pred_fallthru
      _
    // Predicated region
    $region34: #{tpu_custom_call.1} parent=1 // pred_check
      _
    $region35: #{tpu_custom_call.1} parent=1 // pred_check_branch
      %116 = sbr.rel (0) target = $region37
    $region36: #{tpu_custom_call.1} parent=1 // pred_region
      %118 = vsyncadd [#allocation15], 0
      %s119 = sshll.u32 %s8, 4
      %s120 = int_to_ptr.hbm [resolvable:$true] %s119
      %s121 = sshll.u32 [#allocation14], 4
      %s122 = int_to_ptr.vmem [resolvable:$true] %s121
      %127 = dma.hbm_to_vmem [thread:$0]  %s120, 384, %s122, [#allocation15], 128, 128, 8
    $region37: #{tpu_custom_call.1} parent=1 // pred_fallthru
      _
    // Predicated region
    $region38: #{tpu_custom_call.1} parent=1 // pred_check
      _
    $region39: #{tpu_custom_call.1} parent=1 // pred_check_branch
      %129 = sbr.rel (0) target = $region41
    $region40: #{tpu_custom_call.1} parent=1 // pred_region
      _
    $region41: #{tpu_custom_call.1} parent=1 // pred_fallthru
      _
    // Predicated region
    $region42: #{tpu_custom_call.1} parent=1 // pred_check
      _
    $region43: #{tpu_custom_call.1} parent=1 // pred_check_branch
      %131 = sbr.rel (0) target = $region45
    $region44: #{tpu_custom_call.1} parent=1 // pred_region
      _
    $region45: #{tpu_custom_call.1} parent=1 // pred_fallthru
      _
    // Predicated region
    $region46: #{tpu_custom_call.1} parent=1 // pred_check
      _
    $region47: #{tpu_custom_call.1} parent=1 // pred_check_branch
      %133 = sbr.rel (0) target = $region49
    $region48: #{tpu_custom_call.1} parent=1 // pred_region
      _
    $region49: #{tpu_custom_call.1} parent=1 // pred_fallthru
      _
    // Predicated region
    $region50: #{tpu_custom_call.1} parent=1 // pred_check
      _
    $region51: #{tpu_custom_call.1} parent=1 // pred_check_branch
      %135 = sbr.rel (0) target = $region53
    $region52: #{tpu_custom_call.1} parent=1 // pred_region
      _
    $region53: #{tpu_custom_call.1} parent=1 // pred_fallthru
      _
    // Predicated region
    $region54: #{tpu_custom_call.1} parent=1 // pred_check
      _
    $region55: #{tpu_custom_call.1} parent=1 // pred_check_branch
      %137 = sbr.rel (0) target = $region57
    $region56: #{tpu_custom_call.1} parent=1 // pred_region
      _
    $region57: #{tpu_custom_call.1} parent=1 // pred_fallthru
      _
    // Predicated region
    $region58: #{tpu_custom_call.1} parent=1 // pred_check
      _
    $region59: #{tpu_custom_call.1} parent=1 // pred_check_branch
      %139 = sbr.rel (0) target = $region61
    $region60: #{tpu_custom_call.1} parent=1 // pred_region
      _
    $region61: #{tpu_custom_call.1} parent=1 // pred_fallthru
      _
    // Predicated region
    $region62: #{tpu_custom_call.1} parent=1 // pred_check
      _
    $region63: #{tpu_custom_call.1} parent=1 // pred_check_branch
      %141 = sbr.rel (0) target = $region65
    $region64: #{tpu_custom_call.1} parent=1 // pred_region
      _
    $region65: #{tpu_custom_call.1} parent=1 // pred_fallthru
      _
    // Predicated region
    $region66: #{tpu_custom_call.1} parent=1 // pred_check
      _
    $region67: #{tpu_custom_call.1} parent=1 // pred_check_branch
      %143 = sbr.rel (0) target = $region69
    $region68: #{tpu_custom_call.1} parent=1 // pred_region
      _
    $region69: #{tpu_custom_call.1} parent=1 // pred_fallthru
      _
    // Predicated region
    $region70: #{tpu_custom_call.1} parent=1 // pred_check
      _
    $region71: #{tpu_custom_call.1} parent=1 // pred_check_branch
      %145 = sbr.rel (0) target = $region73
    $region72: #{tpu_custom_call.1} parent=1 // pred_region
      _
    $region73: #{tpu_custom_call.1} parent=1 // pred_fallthru
      _
    // Predicated region
    $region74: #{tpu_custom_call.1} parent=1 // pred_check
      _
    $region75: #{tpu_custom_call.1} parent=1 // pred_check_branch
      %147 = sbr.rel (0) target = $region77
    $region76: #{tpu_custom_call.1} parent=1 // pred_region
      %149 = dma.done [#allocation3], 128
    $region77: #{tpu_custom_call.1} parent=1 // pred_fallthru
      _
    // Predicated region
    $region78: #{tpu_custom_call.1} parent=1 // pred_check
      _
    $region79: #{tpu_custom_call.1} parent=1 // pred_check_branch
      %151 = sbr.rel (0) target = $region81
    $region80: #{tpu_custom_call.1} parent=1 // pred_region
      %153 = dma.done [#allocation6], 128
    $region81: #{tpu_custom_call.1} parent=1 // pred_fallthru
      _
    // Predicated region
    $region82: #{tpu_custom_call.1} parent=1 // pred_check
      _
    $region83: #{tpu_custom_call.1} parent=1 // pred_check_branch
      %155 = sbr.rel (0) target = $region85
    $region84: #{tpu_custom_call.1} parent=1 // pred_region
      %157 = dma.done [#allocation6], 384
    $region85: #{tpu_custom_call.1} parent=1 // pred_fallthru
      _
    // Predicated region
    $region86: #{tpu_custom_call.1} parent=1 // pred_check
      _
    $region87: #{tpu_custom_call.1} parent=1 // pred_check_branch
      %159 = sbr.rel (0) target = $region89
    $region88: #{tpu_custom_call.1} parent=1 // pred_region
      %161 = dma.done [#allocation9], 16
    $region89: #{tpu_custom_call.1} parent=1 // pred_fallthru
      _
    // Predicated region
    $region90: #{tpu_custom_call.1} parent=1 // pred_check
      _
    $region91: #{tpu_custom_call.1} parent=1 // pred_check_branch
      %163 = sbr.rel (0) target = $region93
    $region92: #{tpu_custom_call.1} parent=1 // pred_region
      %165 = dma.done [#allocation9], 16
    $region93: #{tpu_custom_call.1} parent=1 // pred_fallthru
      _
    // Predicated region
    $region94: #{tpu_custom_call.1} parent=1 // pred_check
      _
    $region95: #{tpu_custom_call.1} parent=1 // pred_check_branch
      %167 = sbr.rel (0) target = $region97
    $region96: #{tpu_custom_call.1} parent=1 // pred_region
      %169 = dma.done [#allocation12], 16
    $region97: #{tpu_custom_call.1} parent=1 // pred_fallthru
      _
    // Predicated region
    $region98: #{tpu_custom_call.1} parent=1 // pred_check
      _
    $region99: #{tpu_custom_call.1} parent=1 // pred_check_branch
      %171 = sbr.rel (0) target = $region101
    $region100: #{tpu_custom_call.1} parent=1 // pred_region
      %173 = dma.done [#allocation12], 16
    $region101: #{tpu_custom_call.1} parent=1 // pred_fallthru
      _
    // Predicated region
    $region102: #{tpu_custom_call.1} parent=1 // pred_check
      _
    $region103: #{tpu_custom_call.1} parent=1 // pred_check_branch
      %175 = sbr.rel (0) target = $region105
    $region104: #{tpu_custom_call.1} parent=1 // pred_region
      %177 = dma.done [#allocation15], 384
    $region105: #{tpu_custom_call.1} parent=1 // pred_fallthru
      _
    %v178 = vld [vmem:[#allocation2] sm:$0xff]
    %v179 = vld [vmem:[#allocation8] sm:$0x1]
    %v181 = vperm.slane %v179, 0
    %v183 = vsub.f32 %v178, %v181
    %v184 = vld [vmem:[#allocation10] sm:$0x1]
    %v186 = vperm.slane %v184, 0
    %v188 = vrcp.pop %v186
    %v189 = vmul.f32 %v186, %v188
    %v190 = vsub.f32 1.0, %v189
    %v191 = vmul.f32 %v188, %v190
    %v192 = vadd.f32 %v188, %v191
    %vm193 = vweird.f32 %v186
    %vm194 = vweird.f32 %v188
    %vm195 = vmor %vm193, %vm194
    %v196 = vsel %vm195, %v188, %v192
    %v197 = vand.u32 2147483647, %v186
    %vm198 = vcmp.eq.f32.partialorder %v197, 8.507059e+37
    %v199 = vand.u32 %v186, 2147483648
    %v200 = vor.u32 1.1754944e-38, %v199
    %v201 = vsel %vm198, %v200, %v196
    %v202 = vmul.f32 %v183, %v201
    %v203 = vld [vmem:[#allocation5] sm:$0xff]
    %v204 = vld [vmem:[#allocation11] sm:$0x1]
    %v206 = vperm.slane %v204, 0
    %v208 = vsub.f32 %v203, %v206
    %v209 = vld [vmem:[#allocation13] sm:$0x1]
    %v211 = vperm.slane %v209, 0
    %v213 = vrcp.pop %v211
    %v214 = vmul.f32 %v211, %v213
    %v215 = vsub.f32 1.0, %v214
    %v216 = vmul.f32 %v213, %v215
    %v217 = vadd.f32 %v213, %v216
    %vm218 = vweird.f32 %v211
    %vm219 = vweird.f32 %v213
    %vm220 = vmor %vm218, %vm219
    %v221 = vsel %vm220, %v213, %v217
    %v222 = vand.u32 2147483647, %v211
    %vm223 = vcmp.eq.f32.partialorder %v222, 8.507059e+37
    %v224 = vand.u32 %v211, 2147483648
    %v225 = vor.u32 1.1754944e-38, %v224
    %v226 = vsel %vm223, %v225, %v221
    %v227 = vmul.f32 %v208, %v226
    %v228 = vld [vmem:[#allocation14] sm:$0xff]
    %v229 = vld [vmem:[#allocation14 + $0x8] sm:$0xff]
    %v230 = vld [vmem:[#allocation14 + $0x10] sm:$0xff]
    %v231 = vld [vmem:[%s9] sm:$0xff]
    %v232 = vld [vmem:[%s9 + $0x8] sm:$0xff]
    %vm233 = vcmask 130048
    %v235 = vsel %vm233, %v227, 0
    %237 = vmatpush.msra.mxu0 0.0
    %238 = vmatpush.msra.mxu0 0.0
    %239 = vmatpush.msra.mxu0 0.0
    %240 = vmatpush.msra.mxu0 0.0
    %241 = vmatpush.msra.mxu0 0.0
    %242 = vmatpush.msra.mxu0 0.0
    %243 = vmatpush.msra.mxu0 0.0
    %244 = vmatpush.msra.mxu0 0.0
    %245 = vmatpush.msra.mxu0 0.0
    %246 = vmatpush.msra.mxu0 0.0
    %247 = vmatpush.msra.mxu0 0.0
    %248 = vmatpush.msra.mxu0 0.0
    %249 = vmatpush.msra.mxu0 0.0
    %250 = vmatpush.msra.mxu0 0.0
    %251 = vmatpush.msra.mxu0 %v232
    %252 = vmatpush.msra.mxu0 %v231
    %253 = vmatmul.f32.gmra.mxu0 %v235
    %v254 = vpop.f32.mrf.mxu0
    %v255 = vadd.f32 0.0, %v254
    %256 = vdwg.mxu0
    %vm257 = vcmask 195584
    %v259 = vsel %vm257, %v202, 0
    %261 = vmatpush.msra.mxu0 0.0
    %262 = vmatpush.msra.mxu0 0.0
    %263 = vmatpush.msra.mxu0 0.0
    %264 = vmatpush.msra.mxu0 0.0
    %265 = vmatpush.msra.mxu0 0.0
    %266 = vmatpush.msra.mxu0 0.0
    %267 = vmatpush.msra.mxu0 0.0
    %268 = vmatpush.msra.mxu0 0.0
    %269 = vmatpush.msra.mxu0 0.0
    %270 = vmatpush.msra.mxu0 0.0
    %271 = vmatpush.msra.mxu0 0.0
    %272 = vmatpush.msra.mxu0 0.0
    %273 = vmatpush.msra.mxu0 0.0
    %274 = vmatpush.msra.mxu0 %v230
    %275 = vmatpush.msra.mxu0 %v229
    %276 = vmatpush.msra.mxu0 %v228
    %277 = vmatmul.f32.gmra.mxu0 %v259
    %v278 = vpop.f32.mrf.mxu0
    %v279 = vadd.f32 %v255, %v278
    %280 = vdwg.mxu0
    %v281 = vld [vmem:[%s10] sm:$0x1]
    %v283 = vperm.slane %v281, 0
    %v285 = vadd.f32 %v279, %v283
    %vm286 = vcmp.gt.f32.partialorder %v285, 0.0
    %v287 = vmin.f32 %v285, 0.0
    %v288 = vmul.f32 %v287, 1.442695
    %v289 = vpow.pop %v288
    %v290 = vsub.f32 %v289, 1.0
    %v291 = vsel %vm286, %v285, %v290
    %v292 = vld [vmem:[%s11] sm:$0xff]
    %v293 = vld [vmem:[%s11 + $0x8] sm:$0xff]
    %v294 = vld [vmem:[%s11 + $0x10] sm:$0xff]
    %v295 = vld [vmem:[%s11 + $0x18] sm:$0xff]
    %v296 = vld [vmem:[%s11 + $0x20] sm:$0xff]
    %v297 = vld [vmem:[%s11 + $0x28] sm:$0xff]
    %v298 = vld [vmem:[%s11 + $0x30] sm:$0xff]
    %v299 = vld [vmem:[%s11 + $0x38] sm:$0xff]
    %v300 = vld [vmem:[%s12] sm:$0x1]
    %v302 = vperm.slane %v300, 0
    %vm304 = vcmask 523264
    %v306 = vsel %vm304, %v291, 0
    %308 = vmatpush.msra.mxu0 0.0
    %309 = vmatpush.msra.mxu0 0.0
    %310 = vmatpush.msra.mxu0 0.0
    %311 = vmatpush.msra.mxu0 0.0
    %312 = vmatpush.msra.mxu0 0.0
    %313 = vmatpush.msra.mxu0 0.0
    %314 = vmatpush.msra.mxu0 0.0
    %315 = vmatpush.msra.mxu0 0.0
    %316 = vmatpush.msra.mxu0 %v299
    %317 = vmatpush.msra.mxu0 %v298
    %318 = vmatpush.msra.mxu0 %v297
    %319 = vmatpush.msra.mxu0 %v296
    %320 = vmatpush.msra.mxu0 %v295
    %321 = vmatpush.msra.mxu0 %v294
    %322 = vmatpush.msra.mxu0 %v293
    %323 = vmatpush.msra.mxu0 %v292
    %324 = vmatmul.f32.gmra.mxu0 %v306
    %v325 = vpop.f32.mrf.mxu0
    %v326 = vadd.f32 %v302, %v325
    %327 = vdwg.mxu0
    %328 = vst.msk [vmem:[#allocation16] sm:$0xff] %vm304, %v326
    %v329 = vld [vmem:[#allocation7] sm:$0xff]
    %v330 = vld [vmem:[#allocation7 + $0x8] sm:$0xff]
    %v331 = vld [vmem:[#allocation7 + $0x10] sm:$0xff]
    %v332 = vld [vmem:[%s3] sm:$0xff]
    %v333 = vld [vmem:[%s3 + $0x8] sm:$0xff]
    %v334 = vld [vmem:[%s3 + $0x10] sm:$0xff]
    %v335 = vsub.f32 %v329, 0.5
    %v336 = vsub.f32 %v330, 0.5
    %v337 = vsub.f32 %v331, 0.5
    %339 = vset.pattern.permute.xlu0 0
    %340 = vperm.xlu0 %339, %v332
    %v341 = vpop.permute.xlu0 %340
    %344 = vset.pattern.permute.xlu0 0
    %345 = vperm.xlu0 %344, %v333
    %v346 = vpop.permute.xlu0 %345
    %349 = vset.pattern.permute.xlu0 0
    %350 = vperm.xlu0 %349, %v334
    %v351 = vpop.permute.xlu0 %350
    %v353 = vmul.f32 %v341, %v335
    %v354 = vmul.f32 %v346, %v336
    %v355 = vmul.f32 %v351, %v337
    %v356 = vadd.f32 %v353, 0.5
    %v357 = vadd.f32 %v354, 0.5
    %v358 = vadd.f32 %v355, 0.5
    %v359 = vmax.f32 %v356, 1e-20
    %v360 = vmax.f32 %v357, 1e-20
    %v361 = vmax.f32 %v358, 1e-20
    %v362 = vmin.f32 %v359, 0.9999999
    %v363 = vmin.f32 %v360, 0.9999999
    %v364 = vmin.f32 %v361, 0.9999999
    %v365 = vadd.f32 %v362, 1e-20
    %v366 = vadd.f32 %v363, 1e-20
    %v367 = vadd.f32 %v364, 1e-20
    %v368 = vlog2.pop %v365
    %v369 = vmul.f32 %v368, 0.6931472
    %v370 = vlog2.pop %v366
    %v371 = vmul.f32 %v370, 0.6931472
    %v372 = vlog2.pop %v367
    %v373 = vmul.f32 %v372, 0.6931472
    %v374 = vsub.f32 0.0, %v369
    %v375 = vsub.f32 0.0, %v371
    %v376 = vsub.f32 0.0, %v373
    %v377 = vadd.f32 %v374, 1e-20
    %v378 = vadd.f32 %v375, 1e-20
    %v379 = vadd.f32 %v376, 1e-20
    %v380 = vlog2.pop %v377
    %v381 = vmul.f32 %v380, 0.6931472
    %v382 = vlog2.pop %v378
    %v383 = vmul.f32 %v382, 0.6931472
    %v384 = vlog2.pop %v379
    %v385 = vmul.f32 %v384, 0.6931472
    %v386 = vsub.f32 0.0, %v381
    %v387 = vsub.f32 0.0, %v383
    %v388 = vsub.f32 0.0, %v385
    %v389 = vadd.f32 %v326, %v386
    %v390 = vadd.f32 %v326, %v387
    %v391 = vadd.f32 %v326, %v388
    %v392 = vlaneseq
    %v393 = vand.u32 %v392, 127
    %vm394 = vcmp.ge.s32.totalorder %v393, 0
    %vm395 = vcmp.lt.s32.totalorder %v393, 8
    %vm396 = vmand %vm394, %vm395
    %v397 = vsel %vm396, %v389, -inf
    %v398 = vsel %vm396, %v390, -inf
    %v399 = vsel %vm396, %v391, -inf
    %v400 = vsel %vm304, %v397, -inf
    %401 = vmax.xlane.f32.xlu0 %v400
    %v402 = vpop.xlane.xlu0 %401
    %v403 = vsel %vm304, %v398, -inf
    %404 = vmax.xlane.f32.xlu0 %v403
    %v405 = vpop.xlane.xlu0 %404
    %v406 = vsel %vm304, %v399, -inf
    %407 = vmax.xlane.f32.xlu0 %v406
    %v408 = vpop.xlane.xlu0 %407
    %v409 = vsel %vm396, %v402, 0.0
    %v410 = vsel %vm396, %v405, 0.0
    %v411 = vsel %vm396, %v408, 0.0
    %vm412 = vcmp.ge.s32.totalorder %v393, 8
    %vm413 = vcmp.lt.s32.totalorder %v393, 16
    %vm414 = vmand %vm412, %vm413
    %v415 = vsel %vm414, %v389, -inf
    %v416 = vsel %vm414, %v390, -inf
    %v417 = vsel %vm414, %v391, -inf
    %v418 = vsel %vm304, %v415, -inf
    %419 = vmax.xlane.f32.xlu0 %v418
    %v420 = vpop.xlane.xlu0 %419
    %v421 = vsel %vm304, %v416, -inf
    %422 = vmax.xlane.f32.xlu0 %v421
    %v423 = vpop.xlane.xlu0 %422
    %v424 = vsel %vm304, %v417, -inf
    %425 = vmax.xlane.f32.xlu0 %v424
    %v426 = vpop.xlane.xlu0 %425
    %v427 = vsel %vm414, %v420, %v409
    %v428 = vsel %vm414, %v423, %v410
    %v429 = vsel %vm414, %v426, %v411
    %vm430 = vcmp.ge.s32.totalorder %v393, 16
    %vm431 = vcmp.lt.s32.totalorder %v393, 24
    %vm432 = vmand %vm430, %vm431
    %v433 = vsel %vm432, %v389, -inf
    %v434 = vsel %vm432, %v390, -inf
    %v435 = vsel %vm432, %v391, -inf
    %v436 = vsel %vm304, %v433, -inf
    %437 = vmax.xlane.f32.xlu0 %v436
    %v438 = vpop.xlane.xlu0 %437
    %v439 = vsel %vm304, %v434, -inf
    %440 = vmax.xlane.f32.xlu0 %v439
    %v441 = vpop.xlane.xlu0 %440
    %v442 = vsel %vm304, %v435, -inf
    %443 = vmax.xlane.f32.xlu0 %v442
    %v444 = vpop.xlane.xlu0 %443
    %v445 = vsel %vm432, %v438, %v427
    %v446 = vsel %vm432, %v441, %v428
    %v447 = vsel %vm432, %v444, %v429
    %vm448 = vcmp.ge.s32.totalorder %v393, 24
    %vm449 = vcmp.lt.s32.totalorder %v393, 32
    %vm450 = vmand %vm448, %vm449
    %v451 = vsel %vm450, %v389, -inf
    %v452 = vsel %vm450, %v390, -inf
    %v453 = vsel %vm450, %v391, -inf
    %v454 = vsel %vm304, %v451, -inf
    %455 = vmax.xlane.f32.xlu0 %v454
    %v456 = vpop.xlane.xlu0 %455
    %v457 = vsel %vm304, %v452, -inf
    %458 = vmax.xlane.f32.xlu0 %v457
    %v459 = vpop.xlane.xlu0 %458
    %v460 = vsel %vm304, %v453, -inf
    %461 = vmax.xlane.f32.xlu0 %v460
    %v462 = vpop.xlane.xlu0 %461
    %v463 = vsel %vm450, %v456, %v445
    %v464 = vsel %vm450, %v459, %v446
    %v465 = vsel %vm450, %v462, %v447
    %vm466 = vcmp.ge.s32.totalorder %v393, 32
    %vm467 = vcmp.lt.s32.totalorder %v393, 40
    %vm468 = vmand %vm466, %vm467
    %v469 = vsel %vm468, %v389, -inf
    %v470 = vsel %vm468, %v390, -inf
    %v471 = vsel %vm468, %v391, -inf
    %v472 = vsel %vm304, %v469, -inf
    %473 = vmax.xlane.f32.xlu0 %v472
    %v474 = vpop.xlane.xlu0 %473
    %v475 = vsel %vm304, %v470, -inf
    %476 = vmax.xlane.f32.xlu0 %v475
    %v477 = vpop.xlane.xlu0 %476
    %v478 = vsel %vm304, %v471, -inf
    %479 = vmax.xlane.f32.xlu0 %v478
    %v480 = vpop.xlane.xlu0 %479
    %v481 = vsel %vm468, %v474, %v463
    %v482 = vsel %vm468, %v477, %v464
    %v483 = vsel %vm468, %v480, %v465
    %vm484 = vcmp.ge.s32.totalorder %v393, 40
    %vm485 = vcmp.lt.s32.totalorder %v393, 48
    %vm486 = vmand %vm484, %vm485
    %v487 = vsel %vm486, %v389, -inf
    %v488 = vsel %vm486, %v390, -inf
    %v489 = vsel %vm486, %v391, -inf
    %v490 = vsel %vm304, %v487, -inf
    %491 = vmax.xlane.f32.xlu0 %v490
    %v492 = vpop.xlane.xlu0 %491
    %v493 = vsel %vm304, %v488, -inf
    %494 = vmax.xlane.f32.xlu0 %v493
    %v495 = vpop.xlane.xlu0 %494
    %v496 = vsel %vm304, %v489, -inf
    %497 = vmax.xlane.f32.xlu0 %v496
    %v498 = vpop.xlane.xlu0 %497
    %v499 = vsel %vm486, %v492, %v481
    %v500 = vsel %vm486, %v495, %v482
    %v501 = vsel %vm486, %v498, %v483
    %vm502 = vcmp.ge.s32.totalorder %v393, 48
    %vm503 = vcmp.lt.s32.totalorder %v393, 56
    %vm504 = vmand %vm502, %vm503
    %v505 = vsel %vm504, %v389, -inf
    %v506 = vsel %vm504, %v390, -inf
    %v507 = vsel %vm504, %v391, -inf
    %v508 = vsel %vm304, %v505, -inf
    %509 = vmax.xlane.f32.xlu0 %v508
    %v510 = vpop.xlane.xlu0 %509
    %v511 = vsel %vm304, %v506, -inf
    %512 = vmax.xlane.f32.xlu0 %v511
    %v513 = vpop.xlane.xlu0 %512
    %v514 = vsel %vm304, %v507, -inf
    %515 = vmax.xlane.f32.xlu0 %v514
    %v516 = vpop.xlane.xlu0 %515
    %v517 = vsel %vm504, %v510, %v499
    %v518 = vsel %vm504, %v513, %v500
    %v519 = vsel %vm504, %v516, %v501
    %vm520 = vcmp.ge.s32.totalorder %v393, 56
    %vm521 = vcmp.lt.s32.totalorder %v393, 64
    %vm522 = vmand %vm520, %vm521
    %v523 = vsel %vm522, %v389, -inf
    %v524 = vsel %vm522, %v390, -inf
    %v525 = vsel %vm522, %v391, -inf
    %v526 = vsel %vm304, %v523, -inf
    %527 = vmax.xlane.f32.xlu0 %v526
    %v528 = vpop.xlane.xlu0 %527
    %v529 = vsel %vm304, %v524, -inf
    %530 = vmax.xlane.f32.xlu0 %v529
    %v531 = vpop.xlane.xlu0 %530
    %v532 = vsel %vm304, %v525, -inf
    %533 = vmax.xlane.f32.xlu0 %v532
    %v534 = vpop.xlane.xlu0 %533
    %v535 = vsel %vm522, %v528, %v517
    %v536 = vsel %vm522, %v531, %v518
    %v537 = vsel %vm522, %v534, %v519
    %v538 = vsub.f32 %v389, %v535
    %v539 = vsub.f32 %v390, %v536
    %v540 = vsub.f32 %v391, %v537
    %v541 = vmul.f32 %v538, 1.442695
    %v542 = vpow.pop %v541
    %v543 = vmul.f32 %v539, 1.442695
    %v544 = vpow.pop %v543
    %v545 = vmul.f32 %v540, 1.442695
    %v546 = vpow.pop %v545
    %v547 = vld [vmem:[%s13] sm:$0xff]
    %v548 = vld [vmem:[%s13 + $0x8] sm:$0xff]
    %v549 = vld [vmem:[%s13 + $0x10] sm:$0xff]
    %v550 = vld [vmem:[%s13 + $0x18] sm:$0xff]
    %v551 = vld [vmem:[%s13 + $0x20] sm:$0xff]
    %v552 = vld [vmem:[%s13 + $0x28] sm:$0xff]
    %v553 = vld [vmem:[%s13 + $0x30] sm:$0xff]
    %v554 = vld [vmem:[%s13 + $0x38] sm:$0xff]
    %v556 = vsel %vm304, %v542, 0
    %v559 = vsel %vm304, %v544, 0
    %v562 = vsel %vm304, %v546, 0
    %564 = vmatpush.msra.mxu0 0.0
    %565 = vmatpush.msra.mxu0 0.0
    %566 = vmatpush.msra.mxu0 0.0
    %567 = vmatpush.msra.mxu0 0.0
    %568 = vmatpush.msra.mxu0 0.0
    %569 = vmatpush.msra.mxu0 0.0
    %570 = vmatpush.msra.mxu0 0.0
    %571 = vmatpush.msra.mxu0 0.0
    %572 = vmatpush.msra.mxu0 %v554
    %573 = vmatpush.msra.mxu0 %v553
    %574 = vmatpush.msra.mxu0 %v552
    %575 = vmatpush.msra.mxu0 %v551
    %576 = vmatpush.msra.mxu0 %v550
    %577 = vmatpush.msra.mxu0 %v549
    %578 = vmatpush.msra.mxu0 %v548
    %579 = vmatpush.msra.mxu0 %v547
    %580 = vmatmul.f32.gmra.mxu0 %v556
    %v581 = vpop.f32.mrf.mxu0
    %v582 = vadd.f32 0.0, %v581
    %583 = vmatmul.f32.gmra.mxu0 %v559
    %v584 = vpop.f32.mrf.mxu0
    %v585 = vadd.f32 0.0, %v584
    %586 = vmatmul.f32.gmra.mxu0 %v562
    %v587 = vpop.f32.mrf.mxu0
    %v588 = vadd.f32 0.0, %v587
    %589 = vdwg.mxu0
    %v590 = vrcp.pop %v582
    %v591 = vmul.f32 %v582, %v590
    %v592 = vsub.f32 1.0, %v591
    %v593 = vmul.f32 %v590, %v592
    %v594 = vadd.f32 %v590, %v593
    %vm595 = vweird.f32 %v582
    %vm596 = vweird.f32 %v590
    %vm597 = vmor %vm595, %vm596
    %v598 = vsel %vm597, %v590, %v594
    %v599 = vand.u32 2147483647, %v582
    %vm600 = vcmp.eq.f32.partialorder %v599, 8.507059e+37
    %v601 = vand.u32 %v582, 2147483648
    %v602 = vor.u32 1.1754944e-38, %v601
    %v603 = vsel %vm600, %v602, %v598
    %v604 = vmul.f32 %v542, %v603
    %v605 = vrcp.pop %v585
    %v606 = vmul.f32 %v585, %v605
    %v607 = vsub.f32 1.0, %v606
    %v608 = vmul.f32 %v605, %v607
    %v609 = vadd.f32 %v605, %v608
    %vm610 = vweird.f32 %v585
    %vm611 = vweird.f32 %v605
    %vm612 = vmor %vm610, %vm611
    %v613 = vsel %vm612, %v605, %v609
    %v614 = vand.u32 2147483647, %v585
    %vm615 = vcmp.eq.f32.partialorder %v614, 8.507059e+37
    %v616 = vand.u32 %v585, 2147483648
    %v617 = vor.u32 1.1754944e-38, %v616
    %v618 = vsel %vm615, %v617, %v613
    %v619 = vmul.f32 %v544, %v618
    %v620 = vrcp.pop %v588
    %v621 = vmul.f32 %v588, %v620
    %v622 = vsub.f32 1.0, %v621
    %v623 = vmul.f32 %v620, %v622
    %v624 = vadd.f32 %v620, %v623
    %vm625 = vweird.f32 %v588
    %vm626 = vweird.f32 %v620
    %vm627 = vmor %vm625, %vm626
    %v628 = vsel %vm627, %v620, %v624
    %v629 = vand.u32 2147483647, %v588
    %vm630 = vcmp.eq.f32.partialorder %v629, 8.507059e+37
    %v631 = vand.u32 %v588, 2147483648
    %v632 = vor.u32 1.1754944e-38, %v631
    %v633 = vsel %vm630, %v632, %v628
    %v634 = vmul.f32 %v546, %v633
    %635 = vst.msk [vmem:[#allocation17] sm:$0xff] %vm304, %v604
    %636 = vst.msk [vmem:[#allocation17 + $0x8] sm:$0xff] %vm304, %v619
    %637 = vst.msk [vmem:[#allocation17 + $0x10] sm:$0xff] %vm304, %v634
    %vm638 = vcmp.eq.f32.partialorder %v389, %v535
    %vm639 = vcmp.eq.f32.partialorder %v390, %v536
    %vm640 = vcmp.eq.f32.partialorder %v391, %v537
    %v641 = vsel %vm638, 1, 0
    %v642 = vsel %vm639, 1, 0
    %v643 = vsel %vm640, 1, 0
    %v644 = vcvt.s32.f32 %v641
    %v645 = vcvt.s32.f32 %v642
    %v646 = vcvt.s32.f32 %v643
    %647 = vst.msk [vmem:[#allocation19] sm:$0xff] %vm304, %v644
    %648 = vst.msk [vmem:[#allocation19 + $0x8] sm:$0xff] %vm304, %v645
    %649 = vst.msk [vmem:[#allocation19 + $0x10] sm:$0xff] %vm304, %v646
    %v650 = vld [vmem:[%s14] sm:$0xff]
    %v651 = vld [vmem:[%s14 + $0x8] sm:$0xff]
    %v652 = vld [vmem:[%s14 + $0x10] sm:$0xff]
    %v653 = vld [vmem:[%s14 + $0x18] sm:$0xff]
    %v654 = vld [vmem:[%s14 + $0x20] sm:$0xff]
    %v655 = vld [vmem:[%s14 + $0x28] sm:$0xff]
    %v656 = vld [vmem:[%s14 + $0x30] sm:$0xff]
    %v657 = vld [vmem:[%s14 + $0x38] sm:$0xff]
    %v658 = vld [vmem:[%s15] sm:$0x1]
    %v660 = vperm.slane %v658, 0
    %v663 = vsel %vm304, %v644, 0
    %v666 = vsel %vm304, %v645, 0
    %v669 = vsel %vm304, %v646, 0
    %671 = vmatpush.msra.mxu0 0.0
    %672 = vmatpush.msra.mxu0 0.0
    %673 = vmatpush.msra.mxu0 0.0
    %674 = vmatpush.msra.mxu0 0.0
    %675 = vmatpush.msra.mxu0 0.0
    %676 = vmatpush.msra.mxu0 0.0
    %677 = vmatpush.msra.mxu0 0.0
    %678 = vmatpush.msra.mxu0 0.0
    %679 = vmatpush.msra.mxu0 %v657
    %680 = vmatpush.msra.mxu0 %v656
    %681 = vmatpush.msra.mxu0 %v655
    %682 = vmatpush.msra.mxu0 %v654
    %683 = vmatpush.msra.mxu0 %v653
    %684 = vmatpush.msra.mxu0 %v652
    %685 = vmatpush.msra.mxu0 %v651
    %686 = vmatpush.msra.mxu0 %v650
    %687 = vmatmul.f32.gmra.mxu0 %v663
    %v688 = vpop.f32.mrf.mxu0
    %v689 = vadd.f32 %v660, %v688
    %690 = vmatmul.f32.gmra.mxu0 %v666
    %v691 = vpop.f32.mrf.mxu0
    %v692 = vadd.f32 %v660, %v691
    %693 = vmatmul.f32.gmra.mxu0 %v669
    %v694 = vpop.f32.mrf.mxu0
    %v695 = vadd.f32 %v660, %v694
    %696 = vdwg.mxu0
    %vm697 = vcmp.gt.f32.partialorder %v689, 0.0
    %vm698 = vcmp.gt.f32.partialorder %v692, 0.0
    %vm699 = vcmp.gt.f32.partialorder %v695, 0.0
    %v700 = vmin.f32 %v689, 0.0
    %v701 = vmin.f32 %v692, 0.0
    %v702 = vmin.f32 %v695, 0.0
    %v703 = vmul.f32 %v700, 1.442695
    %v704 = vpow.pop %v703
    %v705 = vmul.f32 %v701, 1.442695
    %v706 = vpow.pop %v705
    %v707 = vmul.f32 %v702, 1.442695
    %v708 = vpow.pop %v707
    %v709 = vsub.f32 %v704, 1.0
    %v710 = vsub.f32 %v706, 1.0
    %v711 = vsub.f32 %v708, 1.0
    %v712 = vsel %vm697, %v689, %v709
    %v713 = vsel %vm698, %v692, %v710
    %v714 = vsel %vm699, %v695, %v711
    %v715 = vld [vmem:[%s16] sm:$0xff]
    %v716 = vld [vmem:[%s16 + $0x8] sm:$0xff]
    %v717 = vld [vmem:[%s16 + $0x10] sm:$0xff]
    %v718 = vld [vmem:[%s16 + $0x18] sm:$0xff]
    %v719 = vld [vmem:[%s17] sm:$0x1]
    %v721 = vperm.slane %v719, 0
    %vm723 = vcmask 261120
    %v725 = vsel %vm723, %v712, 0
    %v728 = vsel %vm723, %v713, 0
    %v731 = vsel %vm723, %v714, 0
    %733 = vmatpush.msra.mxu0 0.0
    %734 = vmatpush.msra.mxu0 0.0
    %735 = vmatpush.msra.mxu0 0.0
    %736 = vmatpush.msra.mxu0 0.0
    %737 = vmatpush.msra.mxu0 0.0
    %738 = vmatpush.msra.mxu0 0.0
    %739 = vmatpush.msra.mxu0 0.0
    %740 = vmatpush.msra.mxu0 0.0
    %741 = vmatpush.msra.mxu0 0.0
    %742 = vmatpush.msra.mxu0 0.0
    %743 = vmatpush.msra.mxu0 0.0
    %744 = vmatpush.msra.mxu0 0.0
    %745 = vmatpush.msra.mxu0 %v718
    %746 = vmatpush.msra.mxu0 %v717
    %747 = vmatpush.msra.mxu0 %v716
    %748 = vmatpush.msra.mxu0 %v715
    %749 = vmatmul.f32.gmra.mxu0 %v725
    %v750 = vpop.f32.mrf.mxu0
    %v751 = vadd.f32 %v721, %v750
    %752 = vmatmul.f32.gmra.mxu0 %v728
    %v753 = vpop.f32.mrf.mxu0
    %v754 = vadd.f32 %v721, %v753
    %755 = vmatmul.f32.gmra.mxu0 %v731
    %v756 = vpop.f32.mrf.mxu0
    %v757 = vadd.f32 %v721, %v756
    %758 = vdwg.mxu0
    %v759 = vld [vmem:[#allocation13] sm:$0x1]
    %v761 = vperm.slane %v759, 0
    %v763 = vmul.f32 %v751, %v761
    %v764 = vmul.f32 %v754, %v761
    %v765 = vmul.f32 %v757, %v761
    %v766 = vld [vmem:[#allocation11] sm:$0x1]
    %v768 = vperm.slane %v766, 0
    %v770 = vadd.f32 %v763, %v768
    %v771 = vadd.f32 %v764, %v768
    %v772 = vadd.f32 %v765, %v768
    %773 = vst.msk [vmem:[%s18] sm:$0xff] %vm233, %v770
    %774 = vst.msk [vmem:[%s18 + $0x8] sm:$0xff] %vm233, %v771
    %775 = vst.msk [vmem:[%s18 + $0x10] sm:$0xff] %vm233, %v772
    // Predicated region
    $region106: #{tpu_custom_call.1} parent=1 // pred_check
      _
    $region107: #{tpu_custom_call.1} parent=1 // pred_check_branch
      %777 = sbr.rel (0) target = $region109
    $region108: #{tpu_custom_call.1} parent=1 // pred_region
      _
    $region109: #{tpu_custom_call.1} parent=1 // pred_fallthru
      _
    // Predicated region
    $region110: #{tpu_custom_call.1} parent=1 // pred_check
      _
    $region111: #{tpu_custom_call.1} parent=1 // pred_check_branch
      %779 = sbr.rel (0) target = $region113
    $region112: #{tpu_custom_call.1} parent=1 // pred_region
      %781 = vsyncadd [#allocation4], 0
      %s783 = sshll.u32 [#allocation16], 4
      %s784 = int_to_ptr.vmem [resolvable:$true] %s783
      %s785 = sshll.u32 %s19, 4
      %s786 = int_to_ptr.hbm [resolvable:$true] %s785
      %788 = dma.vmem_to_hbm [thread:$0]  %s784, 128, %s786, [#allocation4]
    $region113: #{tpu_custom_call.1} parent=1 // pred_fallthru
      _
    // Predicated region
    $region114: #{tpu_custom_call.1} parent=1 // pred_check
      _
    $region115: #{tpu_custom_call.1} parent=1 // pred_check_branch
      %790 = sbr.rel (0) target = $region117
    $region116: #{tpu_custom_call.1} parent=1 // pred_region
      %792 = vsyncadd [#allocation18], 0
      %s793 = sshll.u32 [#allocation17], 4
      %s794 = int_to_ptr.vmem [resolvable:$true] %s793
      %s795 = sshll.u32 %s20, 4
      %s796 = int_to_ptr.hbm [resolvable:$true] %s795
      %801 = dma.vmem_to_hbm [thread:$0]  %s794, 384, %s796, [#allocation18], 128, 128, 8
    $region117: #{tpu_custom_call.1} parent=1 // pred_fallthru
      _
    // Predicated region
    $region118: #{tpu_custom_call.1} parent=1 // pred_check
      _
    $region119: #{tpu_custom_call.1} parent=1 // pred_check_branch
      %803 = sbr.rel (0) target = $region121
    $region120: #{tpu_custom_call.1} parent=1 // pred_region
      %805 = vsyncadd [#allocation18], 0
      %s806 = sshll.u32 [#allocation19], 4
      %s807 = int_to_ptr.vmem [resolvable:$true] %s806
      %s808 = sshll.u32 %s21, 4
      %s809 = int_to_ptr.hbm [resolvable:$true] %s808
      %814 = dma.vmem_to_hbm [thread:$0]  %s807, 384, %s809, [#allocation18], 128, 128, 8
    $region121: #{tpu_custom_call.1} parent=1 // pred_fallthru
      _
    // Predicated region
    $region122: #{tpu_custom_call.1} parent=1 // pred_check
      _
    $region123: #{tpu_custom_call.1} parent=1 // pred_check_branch
      %816 = sbr.rel (0) target = $region125
    $region124: #{tpu_custom_call.1} parent=1 // pred_region
      _
    $region125: #{tpu_custom_call.1} parent=1 // pred_fallthru
      _
    // Predicated region
    $region126: #{tpu_custom_call.1} parent=1 // pred_check
      _
    $region127: #{tpu_custom_call.1} parent=1 // pred_check_branch
      %818 = sbr.rel (0) target = $region129
    $region128: #{tpu_custom_call.1} parent=1 // pred_region
      %820 = dma.done [#allocation4], 128
    $region129: #{tpu_custom_call.1} parent=1 // pred_fallthru
      _
    // Predicated region
    $region130: #{tpu_custom_call.1} parent=1 // pred_check
      _
    $region131: #{tpu_custom_call.1} parent=1 // pred_check_branch
      %822 = sbr.rel (0) target = $region133
    $region132: #{tpu_custom_call.1} parent=1 // pred_region
      %824 = dma.done [#allocation18], 384
    $region133: #{tpu_custom_call.1} parent=1 // pred_fallthru
      _
    // Predicated region
    $region134: #{tpu_custom_call.1} parent=1 // pred_check
      _
    $region135: #{tpu_custom_call.1} parent=1 // pred_check_branch
      %826 = sbr.rel (0) target = $region137
    $region136: #{tpu_custom_call.1} parent=1 // pred_region
      %828 = dma.done [#allocation18], 384
    $region137: #{tpu_custom_call.1} parent=1 // pred_fallthru
      _
    %829 = vsyncpa [#allocation3], 1
    %830 = vsyncpa [#allocation6], 1
    %831 = vsyncpa [#allocation9], 1
    %832 = vsyncpa [#allocation12], 1
    %833 = vsyncpa [#allocation15], 1
    %834 = vsyncpa [#allocation4], 1
    %835 = vsyncpa [#allocation18], 1

</llo_original>
